<compile_context>
chip_gen: v7x
topology: tpu7x:2x2x1
jax: 0.10.0
libtpu: 0.0.40
codegen_flags: <defaults>
</compile_context>

<pallas_src>
import jax
import jax.numpy as jnp
from jax.experimental import pallas as pl
from jax.experimental.pallas import tpu as pltpu


def _trend_kernel(k_ref, x_ref, o_ref):
    # k_ref: (1, 2) SMEM scalars [k0, k1]; x_ref / o_ref: VMEM tile.
    k0 = k_ref[0, 0]
    k1 = k_ref[0, 1]
    o_ref[...] = k0 + k1 * x_ref[...]


# Single-block (gridless) path as long as x fits comfortably in VMEM even on
# v7x (64 MiB physical, 32 MiB scoped default).
_SMALL_LIMIT_BYTES = 8 << 20
_ROW_TILE = 1024  # f32 rows per grid step for the large-batch path


def trend_forward(t, k0, k1):
    """y = k0 + k1 * t via a Pallas TPU kernel (elementwise affine)."""
    orig_shape = t.shape
    t2 = t if t.ndim == 2 else t.reshape(-1, orig_shape[-1])
    R, C = t2.shape

    # Pack the two scalar parameters into one SMEM-resident (1, 2) array.
    k = jnp.concatenate(
        [jnp.ravel(k0)[:1], jnp.ravel(k1)[:1]]
    ).reshape(1, 2).astype(t2.dtype)

    nbytes = R * C * t2.dtype.itemsize
    cost = pl.CostEstimate(
        flops=2 * R * C,
        transcendentals=0,
        bytes_accessed=2 * nbytes + 8,
    )

    if nbytes <= _SMALL_LIMIT_BYTES or R <= _ROW_TILE:
        # Gridless: whole array is one VMEM block, scalars in SMEM.
        out = pl.pallas_call(
            _trend_kernel,
            out_shape=jax.ShapeDtypeStruct((R, C), t2.dtype),
            in_specs=[
                pl.BlockSpec(memory_space=pltpu.MemorySpace.SMEM),
                pl.BlockSpec(memory_space=pltpu.MemorySpace.VMEM),
            ],
            out_specs=pl.BlockSpec(memory_space=pltpu.MemorySpace.VMEM),
            cost_estimate=cost,
        )(k, t2)
    else:
        # Large batch: tile rows only (HBM-bandwidth-bound elementwise op),
        # keep the scalar params untiled in SMEM, mark the axis parallel so
        # v7x's two TensorCores split the tiles.
        grid = (pl.cdiv(R, _ROW_TILE),)
        out = pl.pallas_call(
            _trend_kernel,
            out_shape=jax.ShapeDtypeStruct((R, C), t2.dtype),
            grid=grid,
            in_specs=[
                pl.BlockSpec(memory_space=pltpu.MemorySpace.SMEM),
                pl.BlockSpec((_ROW_TILE, C), lambda i: (i, 0)),
            ],
            out_specs=pl.BlockSpec((_ROW_TILE, C), lambda i: (i, 0)),
            compiler_params=pltpu.CompilerParams(
                dimension_semantics=("parallel",)
            ),
            cost_estimate=cost,
        )(k, t2)

    return out.reshape(orig_shape)


class Component:
    """JAX-side mirror of the modularprophet Component bookkeeping (ABC)."""

    def __init__(self, name, feature, id=None):
        self.name = name
        self.feature = feature
        self.n_forecasts = None
        self.id = id
        self.stationary = False
        self.multiply_with = None

    def post_init(self, n_forecasts):
        self.n_forecasts = n_forecasts

    def freeze(self):
        pass

    def extract_features(self, df):
        return df

    def get_features(self):
        return [self.feature]

    def __repr__(self):
        return f"{self.name}{tuple(self.kwargs.values())}"


class Trend(Component):
    def __init__(self, feature="time", key=None):
        super().__init__("Trend", feature)
        self.kwargs = {"feature": feature}
        if key is None:
            key = jax.random.PRNGKey(0)
        k0_key, k1_key = jax.random.split(key)
        # xavier_normal_ on a (1,1) tensor => std = sqrt(2/(1+1)) = 1.
        self.trend_k0 = jax.random.normal(k0_key, (1, 1), jnp.float32)
        self.trend_k1 = jax.random.normal(k1_key, (1, 1), jnp.float32)
        self.stationary = False

    def forward(self, x):
        return trend_forward(x[self.feature], self.trend_k0, self.trend_k1)

    def __call__(self, x):
        return self.forward(x)


if __name__ == "__main__":
    key = jax.random.PRNGKey(0)
    k_param, k_x = jax.random.split(key)

    # Small, module-consistent shapes; last dim = 128 keeps the store lane-dense.
    batch, n_forecasts = 8, 128
    t = jax.random.normal(k_x, (batch, n_forecasts), jnp.float32)

    trend = Trend(feature="time", key=k_param)
    trend.post_init(n_forecasts)

    out = trend({"time": t})
    out = jax.block_until_ready(out)

    # Sanity check against plain JAX reference (same broadcasting as torch).
    ref = trend.trend_k0 + trend.trend_k1 * t
    assert out.shape == (batch, n_forecasts)
    assert jnp.allclose(out, ref, atol=1e-6, rtol=1e-6)

    print("KERNEL_OK")
</pallas_src>

<mosaic_0001>
module attributes {stable_mosaic.version = 11 : i64} {
  func.func @_trend_kernel(%arg0: memref<1x2xf32, #tpu.memory_space<smem>>, %arg1: memref<8x128xf32, #tpu.memory_space<vmem>>, %arg2: memref<8x128xf32, #tpu.memory_space<vmem>>) attributes {dimension_semantics = [], scalar_prefetch = 0 : i64, scratch_operands = 0 : i64, tpu.core_type = #tpu.core_type<tc>} {
    %c0 = arith.constant 0 : index
    %c0_0 = arith.constant 0 : index
    %0 = memref.load %arg0[%c0, %c0_0] : memref<1x2xf32, #tpu.memory_space<smem>>
    %c0_1 = arith.constant 0 : index
    %c1 = arith.constant 1 : index
    %1 = memref.load %arg0[%c0_1, %c1] : memref<1x2xf32, #tpu.memory_space<smem>>
    %c0_2 = arith.constant 0 : index
    %c0_3 = arith.constant 0 : index
    %2 = vector.load %arg1[%c0_2, %c0_3] : memref<8x128xf32, #tpu.memory_space<vmem>>, vector<8x128xf32>
    %3 = vector.broadcast %1 : f32 to vector<8x128xf32>
    %4 = arith.mulf %3, %2 : vector<8x128xf32>
    %5 = vector.broadcast %0 : f32 to vector<8x128xf32>
    %6 = arith.addf %5, %4 : vector<8x128xf32>
    %c0_4 = arith.constant 0 : index
    %c0_5 = arith.constant 0 : index
    %7 = vector.load %arg2[%c0_4, %c0_5] : memref<8x128xf32, #tpu.memory_space<vmem>>, vector<8x128xf32>
    tpu.vector_store %arg2[%c0_4, %c0_5], %6 {strides = array<i32>} : memref<8x128xf32, #tpu.memory_space<vmem>>, vector<8x128xf32>,
    return
  }
}

</mosaic_0001>

<llo_original>
// kernel: tpu_custom_call.1
$region0: #{tpu_custom_call.1}
  #allocation0 [shape = 'u32[]', space=smem, size = 0x4, offset = 0x4, fixed_abs, tag = 'smem constant byte address 0x4 - core index']
  #allocation1 [shape = 'u32[144,128]{1,0:T(1,128)}', space=vmem, size = 0x12000, scoped, tag = 'internal scratch']
  %s0 = inlined_call_operand.hbm [shape: f32[1,2], index: 0, kind: input, shape index: {}]
  %s1 = inlined_call_operand.hbm [shape: f32[8,128], index: 1, kind: input, shape index: {}]
  %s2 = inlined_call_operand.hbm [shape: f32[8,128], index: 2, kind: output, shape index: {}]
  %s3 = sld [smem:[#allocation0]]
  $region26: #{tpu_custom_call.1} parent=0
    _
  %s5 = ssub.s32 1, %s3
  %s6 = scalar_select 0, %s5, %s3
  $region1: #{tpu_custom_call.1} parent=0
    #allocation2 [shape = 'u8[512]{0}', space=smem, size = 0x200, scoped, tag = 'input window, operand 0, single buffered']
    #allocation3 [shape = 's32[1]{0}', space=sflag, size = 0x4, scoped, tag = 'scoped memory for tpu_custom_call.1']
    #allocation4 [shape = 's32[1]{0}', space=sflag, size = 0x4, scoped, tag = 'scoped memory for tpu_custom_call.1']
    #allocation5 [shape = 's32[1]{0}', space=sflag, size = 0x4, scoped, tag = 'scoped memory for tpu_custom_call.1']
    #allocation6 [shape = 'u8[4096]{0}', space=vmem, size = 0x1000, scoped, tag = 'input window, operand 1, single buffered']
    #allocation7 [shape = 'u8[4096]{0}', space=vmem, size = 0x1000, scoped, tag = 'output window, operand 0, single buffered']
    %7 = vsyncpa [#allocation5], 0
    %8 = vsyncpa [#allocation3], 0
    %9 = vsyncpa [#allocation4], 0
    // Predicated region
    $region2: #{tpu_custom_call.1} parent=1 // pred_check
      _
    $region3: #{tpu_custom_call.1} parent=1 // pred_check_branch
      %11 = sbr.rel (0) target = $region5
    $region4: #{tpu_custom_call.1} parent=1 // pred_region
      %s13 = ssub.s32 16, 16
      %14 = vsyncadd [#allocation5], %s13
      %17 = dma.hbm_to_smem %s0, 16, [#allocation2], [#allocation5]
    $region5: #{tpu_custom_call.1} parent=1 // pred_fallthru
      _
    // Predicated region
    $region6: #{tpu_custom_call.1} parent=1 // pred_check
      _
    $region7: #{tpu_custom_call.1} parent=1 // pred_check_branch
      %19 = sbr.rel (0) target = $region9
    $region8: #{tpu_custom_call.1} parent=1 // pred_region
      %s21 = ssub.s32 128, 128
      %22 = vsyncadd [#allocation3], %s21
      %s24 = sshll.u32 [#allocation6], 4
      %s25 = int_to_ptr.vmem [resolvable:$true] %s24
      %27 = dma.hbm_to_vmem [thread:$0]  %s1, 128, %s25, [#allocation3]
    $region9: #{tpu_custom_call.1} parent=1 // pred_fallthru
      _
    // Predicated region
    $region10: #{tpu_custom_call.1} parent=1 // pred_check
      _
    $region11: #{tpu_custom_call.1} parent=1 // pred_check_branch
      %29 = sbr.rel (0) target = $region13
    $region12: #{tpu_custom_call.1} parent=1 // pred_region
      %30 = dma.done [#allocation5], 16
    $region13: #{tpu_custom_call.1} parent=1 // pred_fallthru
      _
    // Predicated region
    $region14: #{tpu_custom_call.1} parent=1 // pred_check
      _
    $region15: #{tpu_custom_call.1} parent=1 // pred_check_branch
      %32 = sbr.rel (0) target = $region17
    $region16: #{tpu_custom_call.1} parent=1 // pred_region
      %33 = dma.done [#allocation3], 128
    $region17: #{tpu_custom_call.1} parent=1 // pred_fallthru
      _
    %34 = sfence
    %s35 = sld [smem:[#allocation2]]
    %s36 = sld [smem:[#allocation2 + $0x1]]
    %v37 = vld [vmem:[#allocation6] sm:$0xff]
    %v38 = vstv %s36
    %v39 = vmul.f32 %v38, %v37
    %v40 = vstv %s35
    %v41 = vadd.f32 %v40, %v39
    %42 = vst [vmem:[#allocation7] sm:$0xff] %v41
    // Predicated region
    $region18: #{tpu_custom_call.1} parent=1 // pred_check
      _
    $region19: #{tpu_custom_call.1} parent=1 // pred_check_branch
      %44 = sbr.rel (0) target = $region21
    $region20: #{tpu_custom_call.1} parent=1 // pred_region
      %s46 = ssub.s32 128, 128
      %47 = vsyncadd [#allocation4], %s46
      %s49 = sshll.u32 [#allocation7], 4
      %s50 = int_to_ptr.vmem [resolvable:$true] %s49
      %52 = dma.vmem_to_hbm [thread:$0]  %s50, 128, %s2, [#allocation4]
    $region21: #{tpu_custom_call.1} parent=1 // pred_fallthru
      _
    // Predicated region
    $region22: #{tpu_custom_call.1} parent=1 // pred_check
      _
    $region23: #{tpu_custom_call.1} parent=1 // pred_check_branch
      %54 = sbr.rel (0) target = $region25
    $region24: #{tpu_custom_call.1} parent=1 // pred_region
      %55 = dma.done [#allocation4], 128
    $region25: #{tpu_custom_call.1} parent=1 // pred_fallthru
      _
    %56 = vsyncpa [#allocation3], 1
    %57 = vsyncpa [#allocation4], 1
    %58 = vsyncpa [#allocation5], 1

</llo_original>
